<compile_context>
chip_gen: v7x
topology: tpu7x:2x2x1
jax: 0.10.0
libtpu: 0.0.40
codegen_flags: <defaults>
</compile_context>

<pallas_src>
import jax
import jax.numpy as jnp
from jax.experimental import pallas as pl
from jax.experimental.pallas import tpu as pltpu

_TILE_M = 512                       # rows per matmul grid step
_VMEM_LIMIT = 64 * 1024 * 1024      # sized for v7x's 64 MiB VMEM (also fine on v5e/v6e)


def _round_up(x, m):
    return (x + m - 1) // m * m


def _cpad(c):
    """Pad a channel count up to a multiple of 128 (lane width)."""
    return _round_up(c, 128)


# ----------------------------------------------------------------------------- kernels


def _make_mm_kernel(act, has_res):
    """y = act(x @ w + bias) [+ residual].  x, w are bf16 (MXU), epilogue in f32."""

    def kernel(*refs):
        if has_res:
            x_ref, w_ref, b_ref, r_ref, o_ref = refs
        else:
            x_ref, w_ref, b_ref, o_ref = refs
        y = jnp.dot(x_ref[...], w_ref[...], preferred_element_type=jnp.float32)
        y = y + b_ref[...]
        if act == "relu6":
            y = jnp.minimum(jnp.maximum(y, 0.0), 6.0)
        if has_res:
            y = y + r_ref[...].astype(jnp.float32)
        o_ref[...] = y.astype(o_ref.dtype)

    return kernel


def _dw_kernel(x_ref, w_ref, b_ref, o_ref):
    """Depthwise 3x3 conv (stride 1, pad already applied) on one (image, 128-channel)
    block.  The 9 taps are built in-kernel from the padded activation (no im2col in
    HBM).  VPU MAC in f32 + bias + ReLU6."""
    H = o_ref.shape[1]
    W = o_ref.shape[2]
    x = x_ref[0].astype(jnp.float32)              # (H+2, W+2, 128)
    acc = None
    for dh in range(3):
        for dw in range(3):
            tap = x[dh:dh + H, dw:dw + W, :]      # (H, W, 128)
            wk = w_ref[dh * 3 + dw, 0].astype(jnp.float32)  # (128,)
            term = tap * wk
            acc = term if acc is None else acc + term
    y = acc + b_ref[0].astype(jnp.float32)
    y = jnp.minimum(jnp.maximum(y, 0.0), 6.0)
    o_ref[0] = y.astype(o_ref.dtype)


def _pool_fc_kernel(x_ref, w_ref, b_ref, o_ref):
    """Fused global average pool over H*W followed by the classifier matmul."""
    xf = x_ref[...].astype(jnp.float32)           # (N, HW, C)
    pooled = jnp.mean(xf, axis=1)                 # (N, C)
    y = jnp.dot(pooled.astype(jnp.bfloat16), w_ref[...],
                preferred_element_type=jnp.float32)
    o_ref[...] = y + b_ref[...]


# ------------------------------------------------------------------------ pallas glue


def _matmul_bn_act(x, w, b, act=None, residual=None):
    """Tiled (over M) matmul + bias (+ReLU6) (+residual).

    x: (M, K) bf16, w: (K, Nc) bf16, b: (1, Nc) f32, residual: (M, Nc) bf16 or None.
    K and Nc are already lane-padded (multiples of 128, or small full-extent dims).
    """
    M, K = x.shape
    Nc = w.shape[1]

    if M <= _TILE_M:
        tile_m, Mp = M, M
    else:
        tile_m = _TILE_M
        Mp = _round_up(M, _TILE_M)
    if Mp != M:
        x = jnp.pad(x, ((0, Mp - M), (0, 0)))
        if residual is not None:
            residual = jnp.pad(residual, ((0, Mp - M), (0, 0)))

    in_specs = [
        pl.BlockSpec((tile_m, K), lambda i: (i, 0)),
        pl.BlockSpec((K, Nc), lambda i: (0, 0)),
        pl.BlockSpec((1, Nc), lambda i: (0, 0)),
    ]
    args = [x, w, b]
    if residual is not None:
        in_specs.append(pl.BlockSpec((tile_m, Nc), lambda i: (i, 0)))
        args.append(residual)

    out = pl.pallas_call(
        _make_mm_kernel(act, residual is not None),
        out_shape=jax.ShapeDtypeStruct((Mp, Nc), jnp.bfloat16),
        grid=(Mp // tile_m,),
        in_specs=in_specs,
        out_specs=pl.BlockSpec((tile_m, Nc), lambda i: (i, 0)),
        compiler_params=pltpu.CompilerParams(
            dimension_semantics=("parallel",),
            vmem_limit_bytes=_VMEM_LIMIT),
    )(*args)
    if Mp != M:
        out = out[:M]
    return out


def dwconv3x3_bn_relu6(x, w9, b, stride):
    """Depthwise 3x3 conv (pad=1).  x: (N, H, W, Cpad) bf16, w9: (9, 1, Cpad) bf16,
    b: (1, Cpad) f32.  Taps are generated inside the kernel; grid = (N, Cpad/128)."""
    N, H, W, C = x.shape
    xp = jnp.pad(x, ((0, 0), (1, 1), (1, 1), (0, 0)))
    out = pl.pallas_call(
        _dw_kernel,
        out_shape=jax.ShapeDtypeStruct((N, H, W, C), jnp.bfloat16),
        grid=(N, C // 128),
        in_specs=[
            pl.BlockSpec((1, H + 2, W + 2, 128), lambda n, c: (n, 0, 0, c)),
            pl.BlockSpec((9, 1, 128), lambda n, c: (0, 0, c)),
            pl.BlockSpec((1, 128), lambda n, c: (0, c)),
        ],
        out_specs=pl.BlockSpec((1, H, W, 128), lambda n, c: (n, 0, 0, c)),
        compiler_params=pltpu.CompilerParams(
            dimension_semantics=("parallel", "parallel"),
            vmem_limit_bytes=_VMEM_LIMIT),
    )(xp, w9, b)
    if stride == 2:
        # k=3, pad=1: stride-2 output == stride-1 output subsampled at even positions.
        out = out[:, ::2, ::2, :]
    return out


def _pool_fc(x, w, b):
    """Fused global average pool + classifier.  x: (N, HW, C) bf16."""
    N, HW, C = x.shape
    NC = w.shape[1]
    return pl.pallas_call(
        _pool_fc_kernel,
        out_shape=jax.ShapeDtypeStruct((N, NC), jnp.float32),
        grid=(1,),
        in_specs=[
            pl.BlockSpec((N, HW, C), lambda i: (0, 0, 0)),
            pl.BlockSpec((C, NC), lambda i: (0, 0)),
            pl.BlockSpec((1, NC), lambda i: (0, 0)),
        ],
        out_specs=pl.BlockSpec((N, NC), lambda i: (0, 0)),
        compiler_params=pltpu.CompilerParams(vmem_limit_bytes=_VMEM_LIMIT),
    )(x, w, b)


# ----------------------------------------------------------------------- conv helpers


def _im2col_taps(x, stride):
    """The 9 shifted views of a 3x3 window (padding=1), each (N, Ho, Wo, C)."""
    N, H, W, C = x.shape
    xp = jnp.pad(x, ((0, 0), (1, 1), (1, 1), (0, 0)))
    Ho = (H + 2 - 3) // stride + 1
    Wo = (W + 2 - 3) // stride + 1
    taps = []
    for dh in range(3):
        for dw in range(3):
            taps.append(
                xp[:, dh: dh + stride * (Ho - 1) + 1: stride,
                       dw: dw + stride * (Wo - 1) + 1: stride, :]
            )
    return taps, Ho, Wo


def conv3x3_stem(x, w, b, stride):
    """Stem 3x3 conv (pad=1) via im2col + tiled matmul kernel.
    w: (Kpad, Cout_pad) bf16 already reshaped/BN-folded/padded."""
    N, H, W, Cin = x.shape
    taps, Ho, Wo = _im2col_taps(x, stride)
    patches = jnp.stack(taps, axis=3).reshape(N * Ho * Wo, 9 * Cin)
    patches = jnp.pad(patches,
                      ((0, 0), (0, w.shape[0] - 9 * Cin))).astype(jnp.bfloat16)
    out = _matmul_bn_act(patches, w, b, act="relu6")
    return out.reshape(N, Ho, Wo, w.shape[1])


# ----------------------------------------------------------------------------- params

INVERTED_RESIDUAL_SETTING = [
    # t (expand ratio), c (out channels), n (repeats), s (first stride)
    (1, 16, 1, 1),
    (6, 24, 2, 2),
    (6, 32, 3, 2),
    (6, 64, 4, 2),
    (6, 96, 3, 1),
    (6, 160, 3, 2),
    (6, 320, 1, 1),
]


def _bn_fold(kg, kb, cout):
    """Inference-mode BN (running_mean=0, running_var=1) -> per-channel scale, bias."""
    gamma = 1.0 + 0.1 * jax.random.normal(kg, (cout,), jnp.float32)
    beta = 0.05 * jax.random.normal(kb, (cout,), jnp.float32)
    running_mean = jnp.zeros((cout,), jnp.float32)
    running_var = jnp.ones((cout,), jnp.float32)
    scale = gamma / jnp.sqrt(running_var + 1e-5)
    bias = beta - running_mean * scale
    return scale, bias


def _stem_init(key, cin, cout):
    kw, kg, kb = jax.random.split(key, 3)
    w = jax.random.normal(kw, (3, 3, cin, cout), jnp.float32) * 0.05
    scale, bias = _bn_fold(kg, kb, cout)
    w = w * scale                                  # fold BN scale into the weight
    wm = w.reshape(9 * cin, cout)
    kp, cp = _cpad(9 * cin), _cpad(cout)
    wm = jnp.pad(wm, ((0, kp - 9 * cin), (0, cp - cout))).astype(jnp.bfloat16)
    b = jnp.pad(bias, (0, cp - cout)).reshape(1, cp).astype(jnp.float32)
    return wm, b


def _pw_init(key, cin, cout):
    kw, kg, kb = jax.random.split(key, 3)
    w = jax.random.normal(kw, (cin, cout), jnp.float32) * 0.05
    scale, bias = _bn_fold(kg, kb, cout)
    w = w * scale
    cinp, coutp = _cpad(cin), _cpad(cout)
    w = jnp.pad(w, ((0, cinp - cin), (0, coutp - cout))).astype(jnp.bfloat16)
    b = jnp.pad(bias, (0, coutp - cout)).reshape(1, coutp).astype(jnp.float32)
    return w, b


def _dw_init(key, c):
    kw, kg, kb = jax.random.split(key, 3)
    w = jax.random.normal(kw, (9, 1, c), jnp.float32) * 0.05
    scale, bias = _bn_fold(kg, kb, c)
    w = w * scale
    cp = _cpad(c)
    w = jnp.pad(w, ((0, 0), (0, 0), (0, cp - c))).astype(jnp.bfloat16)
    b = jnp.pad(bias, (0, cp - c)).reshape(1, cp).astype(jnp.float32)
    return w, b


def init_params(key, num_classes=10):
    keys = iter(jax.random.split(key, 128))
    params = {"num_classes": num_classes}
    params["stem"] = _stem_init(next(keys), 3, 32)           # 3x3 s2, 3 -> 32
    blocks = []
    cin = 32
    for t, c, n, s in INVERTED_RESIDUAL_SETTING:
        for i in range(n):
            stride = s if i == 0 else 1
            hidden = cin * t
            blk = {"stride": stride, "use_res": (stride == 1 and cin == c)}
            if t != 1:
                blk["expand"] = _pw_init(next(keys), cin, hidden)
            blk["dw"] = _dw_init(next(keys), hidden)
            blk["project"] = _pw_init(next(keys), hidden, c)
            blocks.append(blk)
            cin = c
    params["blocks"] = blocks
    params["head"] = _pw_init(next(keys), cin, 1280)          # 1x1, 320 -> 1280
    kw, kb = jax.random.split(next(keys))
    fc_w = jax.random.normal(kw, (1280, num_classes), jnp.float32) * 0.05
    fc_b = 0.01 * jax.random.normal(kb, (num_classes,), jnp.float32)
    ncp = _cpad(num_classes)
    params["fc_w"] = jnp.pad(fc_w, ((0, 0), (0, ncp - num_classes))).astype(jnp.bfloat16)
    params["fc_b"] = jnp.pad(fc_b, (0, ncp - num_classes)).reshape(1, ncp).astype(jnp.float32)
    return params


# ---------------------------------------------------------------------------- forward


def modified_mobilenet_v2_forward(x_nchw, params):
    # PyTorch gives NCHW; convert to NHWC for the TPU kernels.
    x = jnp.transpose(x_nchw, (0, 2, 3, 1)).astype(jnp.float32)

    # stem: Conv 3x3 s2 + BN + ReLU6
    w, b = params["stem"]
    x = conv3x3_stem(x, w, b, stride=2)           # (N, H/2, W/2, 128) bf16

    # inverted residual blocks
    for blk in params["blocks"]:
        inp = x
        N, H, W, Cp = x.shape
        y = x
        if "expand" in blk:
            we, be = blk["expand"]
            y = _matmul_bn_act(y.reshape(N * H * W, Cp), we, be, act="relu6")
            y = y.reshape(N, H, W, we.shape[1])
        wd, bd = blk["dw"]
        y = dwconv3x3_bn_relu6(y, wd, bd, blk["stride"])
        wp, bp = blk["project"]
        N2, Ho, Wo, Hp = y.shape
        res = inp.reshape(N2 * Ho * Wo, wp.shape[1]) if blk["use_res"] else None
        y = _matmul_bn_act(y.reshape(N2 * Ho * Wo, Hp), wp, bp,
                           act=None, residual=res)
        x = y.reshape(N2, Ho, Wo, wp.shape[1])

    # head: Conv 1x1 -> 1280 + BN + ReLU6
    wh, bh = params["head"]
    N, H, W, Cp = x.shape
    x = _matmul_bn_act(x.reshape(N * H * W, Cp), wh, bh, act="relu6")
    x = x.reshape(N, H * W, wh.shape[1])

    # classifier: global average pool, Dropout(0.2), Linear(1280 -> num_classes)
    # TODO(synk): Dropout(p=0.2) is treated as identity (eval-mode forward semantics).
    logits_padded = _pool_fc(x, params["fc_w"], params["fc_b"])
    return logits_padded[:, :params["num_classes"]]


# ------------------------------------------------------------------------------- main

if __name__ == "__main__":
    # Small deterministic input consistent with MobileNetV2 (3 input channels): (N, C, H, W)
    x = jax.random.normal(jax.random.PRNGKey(0), (2, 3, 16, 16), jnp.float32)
    params = init_params(jax.random.PRNGKey(1), num_classes=10)

    logits = modified_mobilenet_v2_forward(x, params)
    logits = jax.block_until_ready(logits)

    assert logits.shape == (2, 10), logits.shape
    assert bool(jnp.all(jnp.isfinite(logits)))
    print("KERNEL_OK")
</pallas_src>

<mosaic_0001>
module attributes {stable_mosaic.version = 11 : i64} {
  func.func @kernel(%arg0: i32, %arg1: memref<128x128xbf16, #tpu.memory_space<vmem>>, %arg2: memref<128x128xbf16, #tpu.memory_space<vmem>>, %arg3: memref<1x128xf32, #tpu.memory_space<vmem>>, %arg4: memref<128x128xbf16, #tpu.memory_space<vmem>>) attributes {dimension_semantics = [#tpu.dimension_semantics<parallel>], iteration_bounds = array<i64: 1>, scalar_prefetch = 0 : i64, scratch_operands = 0 : i64, tpu.core_type = #tpu.core_type<tc>, window_params = [{transform_indices = @transform_0, window_bounds = array<i64: 128, 128>}, {pipeline_mode = #tpu.pipeline_mode<synchronous>, transform_indices = @transform_1, window_bounds = array<i64: 128, 128>}, {pipeline_mode = #tpu.pipeline_mode<synchronous>, transform_indices = @transform_2, window_bounds = array<i64: 1, 128>}, {transform_indices = @transform_3, window_bounds = array<i64: 128, 128>}]} {
    %c0 = arith.constant 0 : index
    %c0_0 = arith.constant 0 : index
    %0 = vector.load %arg1[%c0, %c0_0] : memref<128x128xbf16, #tpu.memory_space<vmem>>, vector<128x128xbf16>
    %c0_1 = arith.constant 0 : index
    %c0_2 = arith.constant 0 : index
    %1 = vector.load %arg2[%c0_1, %c0_2] : memref<128x128xbf16, #tpu.memory_space<vmem>>, vector<128x128xbf16>
    %cst = arith.constant dense<0.000000e+00> : vector<128x128xf32>
    %2 = tpu.matmul %0, %1, %cst {dimension_numbers = #tpu.dot_dimension_numbers<[1], [0], [0], [1], [0, 0, 1, 1], [], []>} : vector<128x128xbf16>, vector<128x128xbf16>, vector<128x128xf32> -> vector<128x128xf32>
    %c0_3 = arith.constant 0 : index
    %c0_4 = arith.constant 0 : index
    %3 = vector.load %arg3[%c0_3, %c0_4] : memref<1x128xf32, #tpu.memory_space<vmem>>, vector<1x128xf32>
    %4 = vector.broadcast %3 : vector<1x128xf32> to vector<128x128xf32>
    %5 = arith.addf %2, %4 : vector<128x128xf32>
    %cst_5 = arith.constant 0.000000e+00 : f32
    %6 = vector.broadcast %cst_5 : f32 to vector<128x128xf32>
    %7 = arith.maximumf %5, %6 : vector<128x128xf32>
    %cst_6 = arith.constant 6.000000e+00 : f32
    %8 = vector.broadcast %cst_6 : f32 to vector<128x128xf32>
    %9 = arith.minimumf %7, %8 : vector<128x128xf32>
    %10 = arith.truncf %9 : vector<128x128xf32> to vector<128x128xbf16>
    %c0_7 = arith.constant 0 : index
    %c0_8 = arith.constant 0 : index
    %11 = vector.load %arg4[%c0_7, %c0_8] : memref<128x128xbf16, #tpu.memory_space<vmem>>, vector<128x128xbf16>
    tpu.vector_store %arg4[%c0_7, %c0_8], %10 {strides = array<i32>} : memref<128x128xbf16, #tpu.memory_space<vmem>>, vector<128x128xbf16>,
    return
  }
  func.func @transform_0(%arg0: i32) -> (i32, i32) {
    %c0_i32 = arith.constant 0 : i32
    %c0_i32_0 = arith.constant 0 : i32
    return %arg0, %c0_i32 : i32, i32
  }
  func.func @transform_1(%arg0: i32) -> (i32, i32) {
    %c0_i32 = arith.constant 0 : i32
    %c0_i32_0 = arith.constant 0 : i32
    %c0_i32_1 = arith.constant 0 : i32
    return %c0_i32, %c0_i32_0 : i32, i32
  }
  func.func @transform_2(%arg0: i32) -> (i32, i32) {
    %c0_i32 = arith.constant 0 : i32
    %c0_i32_0 = arith.constant 0 : i32
    %c0_i32_1 = arith.constant 0 : i32
    return %c0_i32, %c0_i32_0 : i32, i32
  }
  func.func @transform_3(%arg0: i32) -> (i32, i32) {
    %c0_i32 = arith.constant 0 : i32
    %c0_i32_0 = arith.constant 0 : i32
    return %arg0, %c0_i32 : i32, i32
  }
}

</mosaic_0001>

<llo_original>
// kernel: tpu_custom_call.1
$region0: #{tpu_custom_call.1}
  #allocation0 [shape = 'u32[]', space=smem, size = 0x4, offset = 0x4, fixed_abs, tag = 'smem constant byte address 0x4 - core index']
  #allocation1 [shape = 'u32[144,128]{1,0:T(1,128)}', space=vmem, size = 0x12000, scoped, tag = 'internal scratch']
  %s0 = inlined_call_operand.hbm [shape: bf16[128,128], index: 0, kind: input, shape index: {}]
  %s1 = inlined_call_operand.hbm [shape: bf16[128,128], index: 1, kind: input, shape index: {}]
  %s2 = inlined_call_operand.hbm [shape: f32[1,128], index: 2, kind: input, shape index: {}]
  %s3 = inlined_call_operand.hbm [shape: bf16[128,128], index: 3, kind: output, shape index: {}]
  %s4 = sld [smem:[#allocation0]]
  $region34: #{tpu_custom_call.1} parent=0
    _
  %s6 = ssub.s32 1, %s4
  %s7 = scalar_select 0, %s6, %s4
  $region1: #{tpu_custom_call.1} parent=0
    #allocation2 [shape = 'u8[32768]{0}', space=vmem, size = 0x8000, scoped, tag = 'input window, operand 0, single buffered']
    #allocation3 [shape = 's32[1]{0}', space=sflag, size = 0x4, scoped, tag = 'scoped memory for tpu_custom_call.1']
    #allocation4 [shape = 's32[1]{0}', space=sflag, size = 0x4, scoped, tag = 'scoped memory for tpu_custom_call.1']
    #allocation5 [shape = 'u8[32768]{0}', space=vmem, size = 0x8000, scoped, tag = 'input window, operand 1, single buffered']
    #allocation6 [shape = 's32[1]{0}', space=sflag, size = 0x4, scoped, tag = 'scoped memory for tpu_custom_call.1']
    #allocation7 [shape = 'u8[512]{0}', space=vmem, size = 0x400, scoped, tag = 'input window, operand 2, single buffered']
    #allocation8 [shape = 'u8[32768]{0}', space=vmem, size = 0x8000, scoped, tag = 'output window, operand 0, single buffered']
    %8 = vsyncpa [#allocation3], 0
    %9 = vsyncpa [#allocation6], 0
    %10 = vsyncpa [#allocation4], 0
    // Predicated region
    $region2: #{tpu_custom_call.1} parent=1 // pred_check
      _
    $region3: #{tpu_custom_call.1} parent=1 // pred_check_branch
      %12 = sbr.rel (0) target = $region5
    $region4: #{tpu_custom_call.1} parent=1 // pred_region
      %s14 = ssub.s32 1024, 1024
      %15 = vsyncadd [#allocation3], %s14
      %s16 = sshll.u32 [#allocation2], 4
      %s17 = int_to_ptr.vmem [resolvable:$true] %s16
      %22 = dma.hbm_to_vmem [thread:$0]  %s0, 1024, %s17, [#allocation3], 64, 64, 4
    $region5: #{tpu_custom_call.1} parent=1 // pred_fallthru
      _
    // Predicated region
    $region6: #{tpu_custom_call.1} parent=1 // pred_check
      _
    $region7: #{tpu_custom_call.1} parent=1 // pred_check_branch
      %24 = sbr.rel (0) target = $region9
    $region8: #{tpu_custom_call.1} parent=1 // pred_region
      %s26 = ssub.s32 1024, 1024
      %27 = vsyncadd [#allocation6], %s26
      %s28 = sshll.u32 [#allocation5], 4
      %s29 = int_to_ptr.vmem [resolvable:$true] %s28
      %34 = dma.hbm_to_vmem [thread:$0]  %s1, 1024, %s29, [#allocation6], 64, 64, 4
    $region9: #{tpu_custom_call.1} parent=1 // pred_fallthru
      _
    // Predicated region
    $region10: #{tpu_custom_call.1} parent=1 // pred_check
      _
    $region11: #{tpu_custom_call.1} parent=1 // pred_check_branch
      %36 = sbr.rel (0) target = $region13
    $region12: #{tpu_custom_call.1} parent=1 // pred_region
      %s38 = ssub.s32 16, 16
      %39 = vsyncadd [#allocation6], %s38
      %s41 = sshll.u32 [#allocation7], 4
      %s42 = int_to_ptr.vmem [resolvable:$true] %s41
      %44 = dma.hbm_to_vmem [thread:$0]  %s2, 16, %s42, [#allocation6]
    $region13: #{tpu_custom_call.1} parent=1 // pred_fallthru
      _
    // Predicated region
    $region14: #{tpu_custom_call.1} parent=1 // pred_check
      _
    $region15: #{tpu_custom_call.1} parent=1 // pred_check_branch
      %46 = sbr.rel (0) target = $region17
    $region16: #{tpu_custom_call.1} parent=1 // pred_region
      %47 = dma.done [#allocation3], 1024
    $region17: #{tpu_custom_call.1} parent=1 // pred_fallthru
      _
    // Predicated region
    $region18: #{tpu_custom_call.1} parent=1 // pred_check
      _
    $region19: #{tpu_custom_call.1} parent=1 // pred_check_branch
      %49 = sbr.rel (0) target = $region21
    $region20: #{tpu_custom_call.1} parent=1 // pred_region
      %50 = dma.done [#allocation6], 1024
    $region21: #{tpu_custom_call.1} parent=1 // pred_fallthru
      _
    // Predicated region
    $region22: #{tpu_custom_call.1} parent=1 // pred_check
      _
    $region23: #{tpu_custom_call.1} parent=1 // pred_check_branch
      %52 = sbr.rel (0) target = $region25
    $region24: #{tpu_custom_call.1} parent=1 // pred_region
      %53 = dma.done [#allocation6], 16
    $region25: #{tpu_custom_call.1} parent=1 // pred_fallthru
      _
    %v55 = vld [vmem:[#allocation2] sm:$0xf]
    %v56 = vld [vmem:[#allocation2 + $0x4] sm:$0xf]
    %v57 = vld [vmem:[#allocation2 + $0x8] sm:$0xf]
    %v58 = vld [vmem:[#allocation2 + $0xc] sm:$0xf]
    %v59 = vld [vmem:[#allocation2 + $0x10] sm:$0xf]
    %v60 = vld [vmem:[#allocation2 + $0x14] sm:$0xf]
    %v61 = vld [vmem:[#allocation2 + $0x18] sm:$0xf]
    %v62 = vld [vmem:[#allocation2 + $0x1c] sm:$0xf]
    %v63 = vld [vmem:[#allocation2 + $0x20] sm:$0xf]
    %v64 = vld [vmem:[#allocation2 + $0x24] sm:$0xf]
    %v65 = vld [vmem:[#allocation2 + $0x28] sm:$0xf]
    %v66 = vld [vmem:[#allocation2 + $0x2c] sm:$0xf]
    %v67 = vld [vmem:[#allocation2 + $0x30] sm:$0xf]
    %v68 = vld [vmem:[#allocation2 + $0x34] sm:$0xf]
    %v69 = vld [vmem:[#allocation2 + $0x38] sm:$0xf]
    %v70 = vld [vmem:[#allocation2 + $0x3c] sm:$0xf]
    %v71 = vld [vmem:[#allocation5] sm:$0xf]
    %v72 = vld [vmem:[#allocation5 + $0x4] sm:$0xf]
    %v73 = vld [vmem:[#allocation5 + $0x8] sm:$0xf]
    %v74 = vld [vmem:[#allocation5 + $0xc] sm:$0xf]
    %v75 = vld [vmem:[#allocation5 + $0x10] sm:$0xf]
    %v76 = vld [vmem:[#allocation5 + $0x14] sm:$0xf]
    %v77 = vld [vmem:[#allocation5 + $0x18] sm:$0xf]
    %v78 = vld [vmem:[#allocation5 + $0x1c] sm:$0xf]
    %v79 = vld [vmem:[#allocation5 + $0x20] sm:$0xf]
    %v80 = vld [vmem:[#allocation5 + $0x24] sm:$0xf]
    %v81 = vld [vmem:[#allocation5 + $0x28] sm:$0xf]
    %v82 = vld [vmem:[#allocation5 + $0x2c] sm:$0xf]
    %v83 = vld [vmem:[#allocation5 + $0x30] sm:$0xf]
    %v84 = vld [vmem:[#allocation5 + $0x34] sm:$0xf]
    %v85 = vld [vmem:[#allocation5 + $0x38] sm:$0xf]
    %v86 = vld [vmem:[#allocation5 + $0x3c] sm:$0xf]
    %v87 = vld [vmem:[#allocation7] sm:$0x1]
    %v89 = vlaneseq
    %v90 = vshrl.u32 %v89, 7
    %v91 = vsub.s32 0, %v90
    %v92 = vrot.slane %v87, %v91
    %v110 = vunpack.c.l.b16 %v55
    %v111 = vunpack.c.l.b16 %v56
    %v112 = vunpack.c.l.b16 %v57
    %v113 = vunpack.c.l.b16 %v58
    %v114 = vunpack.c.l.b16 %v59
    %v115 = vunpack.c.l.b16 %v60
    %v116 = vunpack.c.l.b16 %v61
    %v117 = vunpack.c.l.b16 %v62
    %v118 = vunpack.c.l.b16 %v63
    %v119 = vunpack.c.l.b16 %v64
    %v120 = vunpack.c.l.b16 %v65
    %v121 = vunpack.c.l.b16 %v66
    %v122 = vunpack.c.l.b16 %v67
    %v123 = vunpack.c.l.b16 %v68
    %v124 = vunpack.c.l.b16 %v69
    %v125 = vunpack.c.l.b16 %v70
    %v126 = vpack.c.b16 %v111, %v110
    %v127 = vpack.c.b16 %v113, %v112
    %v128 = vpack.c.b16 %v115, %v114
    %v129 = vpack.c.b16 %v117, %v116
    %v130 = vpack.c.b16 %v119, %v118
    %v131 = vpack.c.b16 %v121, %v120
    %v132 = vpack.c.b16 %v123, %v122
    %v133 = vpack.c.b16 %v125, %v124
    %v158 = vunpack.c.l.b16 %v71
    %v159 = vunpack.c.l.b16 %v72
    %v160 = vunpack.c.l.b16 %v73
    %v161 = vunpack.c.l.b16 %v74
    %v162 = vunpack.c.l.b16 %v75
    %v163 = vunpack.c.l.b16 %v76
    %v164 = vunpack.c.l.b16 %v77
    %v165 = vunpack.c.l.b16 %v78
    %v166 = vunpack.c.l.b16 %v79
    %v167 = vunpack.c.l.b16 %v80
    %v168 = vunpack.c.l.b16 %v81
    %v169 = vunpack.c.l.b16 %v82
    %v170 = vunpack.c.l.b16 %v83
    %v171 = vunpack.c.l.b16 %v84
    %v172 = vunpack.c.l.b16 %v85
    %v173 = vunpack.c.l.b16 %v86
    %v174 = vpack.c.b16 %v159, %v158
    %v175 = vpack.c.b16 %v161, %v160
    %v176 = vpack.c.b16 %v163, %v162
    %v177 = vpack.c.b16 %v165, %v164
    %v178 = vpack.c.b16 %v167, %v166
    %v179 = vpack.c.b16 %v169, %v168
    %v180 = vpack.c.b16 %v171, %v170
    %v181 = vpack.c.b16 %v173, %v172
    %190 = vmatprep.subr.bf16.mxu0 0
    %191 = vmatpush1.bf16.msra.mxu0 %v174
    %192 = vmatprep.subr.bf16.mxu0 0
    %193 = vmatpush1.bf16.msra.mxu0 %v175
    %194 = vmatprep.subr.bf16.mxu0 0
    %195 = vmatpush1.bf16.msra.mxu0 %v176
    %196 = vmatprep.subr.bf16.mxu0 0
    %197 = vmatpush1.bf16.msra.mxu0 %v177
    %198 = vmatprep.subr.bf16.mxu0 0
    %199 = vmatpush1.bf16.msra.mxu0 %v178
    %200 = vmatprep.subr.bf16.mxu0 0
    %201 = vmatpush1.bf16.msra.mxu0 %v179
    %202 = vmatprep.subr.bf16.mxu0 0
    %203 = vmatpush1.bf16.msra.mxu0 %v180
    %204 = vmatprep.subr.bf16.mxu0 0
    %205 = vmatpush1.bf16.msra.mxu0 %v181
    %206 = vmatprep.subr.bf16.mxu0 0
    %207 = vmatpush1.bf16.msra.mxu0 0
    %208 = vmatprep.subr.bf16.mxu0 0
    %209 = vmatpush1.bf16.msra.mxu0 0
    %210 = vmatprep.subr.bf16.mxu0 0
    %211 = vmatpush1.bf16.msra.mxu0 0
    %212 = vmatprep.subr.bf16.mxu0 0
    %213 = vmatpush1.bf16.msra.mxu0 0
    %214 = vmatprep.subr.bf16.mxu0 0
    %215 = vmatpush1.bf16.msra.mxu0 0
    %216 = vmatprep.subr.bf16.mxu0 0
    %217 = vmatpush1.bf16.msra.mxu0 0
    %218 = vmatprep.subr.bf16.mxu0 0
    %219 = vmatpush1.bf16.msra.mxu0 0
    %220 = vmatprep.subr.bf16.mxu0 0
    %221 = vmatpush1.bf16.msra.mxu0 0
    %222 = vmatprep.mubr.bf16.mxu0 0
    %223 = vmatmul.mubr.bf16.gmra.mrb[0].mxu0 %v126
    %v224 = vpop.f32.mrb[0].mxu0
    %v225 = vadd.f32 %v92, %v224
    %v226 = vpop.f32.mrb[0].mxu0
    %v227 = vpop.f32.mrb[0].mxu0
    %v228 = vadd.f32 %v92, %v227
    %v229 = vpop.f32.mrb[0].mxu0
    %230 = vmatprep.mubr.bf16.mxu0 0
    %231 = vmatmul.mubr.bf16.gmra.mrb[0].mxu0 %v127
    %v232 = vpop.f32.mrb[0].mxu0
    %v233 = vadd.f32 %v92, %v232
    %v234 = vpop.f32.mrb[0].mxu0
    %v235 = vpop.f32.mrb[0].mxu0
    %v236 = vadd.f32 %v92, %v235
    %v237 = vpop.f32.mrb[0].mxu0
    %238 = vmatprep.mubr.bf16.mxu0 0
    %239 = vmatmul.mubr.bf16.gmra.mrb[0].mxu0 %v128
    %v240 = vpop.f32.mrb[0].mxu0
    %v241 = vadd.f32 %v92, %v240
    %v242 = vpop.f32.mrb[0].mxu0
    %v243 = vpop.f32.mrb[0].mxu0
    %v244 = vadd.f32 %v92, %v243
    %v245 = vpop.f32.mrb[0].mxu0
    %246 = vmatprep.mubr.bf16.mxu0 0
    %247 = vmatmul.mubr.bf16.gmra.mrb[0].mxu0 %v129
    %v248 = vpop.f32.mrb[0].mxu0
    %v249 = vadd.f32 %v92, %v248
    %v250 = vpop.f32.mrb[0].mxu0
    %v251 = vpop.f32.mrb[0].mxu0
    %v252 = vadd.f32 %v92, %v251
    %v253 = vpop.f32.mrb[0].mxu0
    %254 = vmatprep.mubr.bf16.mxu0 0
    %255 = vmatmul.mubr.bf16.gmra.mrb[0].mxu0 %v130
    %v256 = vpop.f32.mrb[0].mxu0
    %v257 = vadd.f32 %v92, %v256
    %v258 = vpop.f32.mrb[0].mxu0
    %v259 = vpop.f32.mrb[0].mxu0
    %v260 = vadd.f32 %v92, %v259
    %v261 = vpop.f32.mrb[0].mxu0
    %262 = vmatprep.mubr.bf16.mxu0 0
    %263 = vmatmul.mubr.bf16.gmra.mrb[0].mxu0 %v131
    %v264 = vpop.f32.mrb[0].mxu0
    %v265 = vadd.f32 %v92, %v264
    %v266 = vpop.f32.mrb[0].mxu0
    %v267 = vpop.f32.mrb[0].mxu0
    %v268 = vadd.f32 %v92, %v267
    %v269 = vpop.f32.mrb[0].mxu0
    %270 = vmatprep.mubr.bf16.mxu0 0
    %271 = vmatmul.mubr.bf16.gmra.mrb[0].mxu0 %v132
    %v272 = vpop.f32.mrb[0].mxu0
    %v273 = vadd.f32 %v92, %v272
    %v274 = vpop.f32.mrb[0].mxu0
    %v275 = vpop.f32.mrb[0].mxu0
    %v276 = vadd.f32 %v92, %v275
    %v277 = vpop.f32.mrb[0].mxu0
    %278 = vmatprep.mubr.bf16.mxu0 0
    %279 = vmatmul.mubr.bf16.gmra.mrb[0].mxu0 %v133
    %v280 = vpop.f32.mrb[0].mxu0
    %v281 = vadd.f32 %v92, %v280
    %v282 = vpop.f32.mrb[0].mxu0
    %v283 = vpop.f32.mrb[0].mxu0
    %v284 = vadd.f32 %v92, %v283
    %v285 = vpop.f32.mrb[0].mxu0
    %286 = vdwg.mxu0
    %v287 = vmax.f32 %v225, 0.0
    %v288 = vmax.f32 %v228, 0.0
    %v289 = vmax.f32 %v233, 0.0
    %v290 = vmax.f32 %v236, 0.0
    %v291 = vmax.f32 %v241, 0.0
    %v292 = vmax.f32 %v244, 0.0
    %v293 = vmax.f32 %v249, 0.0
    %v294 = vmax.f32 %v252, 0.0
    %v295 = vmax.f32 %v257, 0.0
    %v296 = vmax.f32 %v260, 0.0
    %v297 = vmax.f32 %v265, 0.0
    %v298 = vmax.f32 %v268, 0.0
    %v299 = vmax.f32 %v273, 0.0
    %v300 = vmax.f32 %v276, 0.0
    %v301 = vmax.f32 %v281, 0.0
    %v302 = vmax.f32 %v284, 0.0
    %v303 = vmin.f32 %v287, 6.0
    %v304 = vmin.f32 %v288, 6.0
    %v305 = vmin.f32 %v289, 6.0
    %v306 = vmin.f32 %v290, 6.0
    %v307 = vmin.f32 %v291, 6.0
    %v308 = vmin.f32 %v292, 6.0
    %v309 = vmin.f32 %v293, 6.0
    %v310 = vmin.f32 %v294, 6.0
    %v311 = vmin.f32 %v295, 6.0
    %v312 = vmin.f32 %v296, 6.0
    %v313 = vmin.f32 %v297, 6.0
    %v314 = vmin.f32 %v298, 6.0
    %v315 = vmin.f32 %v299, 6.0
    %v316 = vmin.f32 %v300, 6.0
    %v317 = vmin.f32 %v301, 6.0
    %v318 = vmin.f32 %v302, 6.0
    %v319 = vpack.c.bf16 %v304, %v303
    %v320 = vpack.c.bf16 %v306, %v305
    %v321 = vpack.c.bf16 %v308, %v307
    %v322 = vpack.c.bf16 %v310, %v309
    %v323 = vpack.c.bf16 %v312, %v311
    %v324 = vpack.c.bf16 %v314, %v313
    %v325 = vpack.c.bf16 %v316, %v315
    %v326 = vpack.c.bf16 %v318, %v317
    %v335 = vunpack.c.l.b16 %v319
    %v336 = vunpack.c.h.b16 %v319
    %v337 = vunpack.c.l.b16 %v320
    %v338 = vunpack.c.h.b16 %v320
    %v339 = vunpack.c.l.b16 %v321
    %v340 = vunpack.c.h.b16 %v321
    %v341 = vunpack.c.l.b16 %v322
    %v342 = vunpack.c.h.b16 %v322
    %v343 = vunpack.c.l.b16 %v323
    %v344 = vunpack.c.h.b16 %v323
    %v345 = vunpack.c.l.b16 %v324
    %v346 = vunpack.c.h.b16 %v324
    %v347 = vunpack.c.l.b16 %v325
    %v348 = vunpack.c.h.b16 %v325
    %v349 = vunpack.c.l.b16 %v326
    %v350 = vunpack.c.h.b16 %v326
    %v351 = vpack.c.b16 %v335, %v335
    %v352 = vpack.c.b16 %v336, %v336
    %v353 = vpack.c.b16 %v337, %v337
    %v354 = vpack.c.b16 %v338, %v338
    %v355 = vpack.c.b16 %v339, %v339
    %v356 = vpack.c.b16 %v340, %v340
    %v357 = vpack.c.b16 %v341, %v341
    %v358 = vpack.c.b16 %v342, %v342
    %v359 = vpack.c.b16 %v343, %v343
    %v360 = vpack.c.b16 %v344, %v344
    %v361 = vpack.c.b16 %v345, %v345
    %v362 = vpack.c.b16 %v346, %v346
    %v363 = vpack.c.b16 %v347, %v347
    %v364 = vpack.c.b16 %v348, %v348
    %v365 = vpack.c.b16 %v349, %v349
    %v366 = vpack.c.b16 %v350, %v350
    %383 = vst [vmem:[#allocation8] sm:$0xf] %v351
    %384 = vst [vmem:[#allocation8 + $0x4] sm:$0xf] %v352
    %385 = vst [vmem:[#allocation8 + $0x8] sm:$0xf] %v353
    %386 = vst [vmem:[#allocation8 + $0xc] sm:$0xf] %v354
    %387 = vst [vmem:[#allocation8 + $0x10] sm:$0xf] %v355
    %388 = vst [vmem:[#allocation8 + $0x14] sm:$0xf] %v356
    %389 = vst [vmem:[#allocation8 + $0x18] sm:$0xf] %v357
    %390 = vst [vmem:[#allocation8 + $0x1c] sm:$0xf] %v358
    %391 = vst [vmem:[#allocation8 + $0x20] sm:$0xf] %v359
    %392 = vst [vmem:[#allocation8 + $0x24] sm:$0xf] %v360
    %393 = vst [vmem:[#allocation8 + $0x28] sm:$0xf] %v361
    %394 = vst [vmem:[#allocation8 + $0x2c] sm:$0xf] %v362
    %395 = vst [vmem:[#allocation8 + $0x30] sm:$0xf] %v363
    %396 = vst [vmem:[#allocation8 + $0x34] sm:$0xf] %v364
    %397 = vst [vmem:[#allocation8 + $0x38] sm:$0xf] %v365
    %398 = vst [vmem:[#allocation8 + $0x3c] sm:$0xf] %v366
    // Predicated region
    $region26: #{tpu_custom_call.1} parent=1 // pred_check
      _
    $region27: #{tpu_custom_call.1} parent=1 // pred_check_branch
      %400 = sbr.rel (0) target = $region29
    $region28: #{tpu_custom_call.1} parent=1 // pred_region
      %s402 = ssub.s32 1024, 1024
      %403 = vsyncadd [#allocation4], %s402
      %s404 = sshll.u32 [#allocation8], 4
      %s405 = int_to_ptr.vmem [resolvable:$true] %s404
      %410 = dma.vmem_to_hbm [thread:$0]  %s405, 1024, %s3, [#allocation4], 64, 64, 4
    $region29: #{tpu_custom_call.1} parent=1 // pred_fallthru
      _
    // Predicated region
    $region30: #{tpu_custom_call.1} parent=1 // pred_check
      _
    $region31: #{tpu_custom_call.1} parent=1 // pred_check_branch
      %412 = sbr.rel (0) target = $region33
    $region32: #{tpu_custom_call.1} parent=1 // pred_region
      %413 = dma.done [#allocation4], 1024
    $region33: #{tpu_custom_call.1} parent=1 // pred_fallthru
      _
    %414 = vsyncpa [#allocation3], 1
    %415 = vsyncpa [#allocation6], 1
    %416 = vsyncpa [#allocation4], 1

</llo_original>
